<compile_context>
chip_gen: v7x
topology: tpu7x:2x2x1
jax: 0.10.0
libtpu: 0.0.40
codegen_flags: <defaults>
</compile_context>

<pallas_src>
import functools

import jax
import jax.numpy as jnp
from jax.experimental import pallas as pl
from jax.experimental.pallas import tpu as pltpu

_LANE = 128          # TPU lane width (last-dim tile)
_SUBLANE = 8         # f32 sublane tile (second-to-last dim)
_MAX_TILE_B = 2048   # upper bound on batch rows per grid step (HBM/overhead sweet spot)
_SINGLE_TILE_B = 256 # batches at/below this run as one grid step (overhead already tiny)


def _round_up(n, m):
    return ((n + m - 1) // m) * m


def _choose_tile_b(batch):
    """Adaptive batch tile: big enough to amortize per-step overhead, small
    enough to avoid padding waste, and >=2 grid steps for non-tiny batches
    (v7x megacore sharding via dimension_semantics=("parallel",))."""
    b8 = _round_up(batch, _SUBLANE)
    if b8 <= _SINGLE_TILE_B:
        return b8
    n_steps = max(2, pl.cdiv(b8, _MAX_TILE_B))
    return _round_up(pl.cdiv(b8, n_steps), _SUBLANE)


def _stable_sigmoid(x):
    # Single EUP op, no exp overflow, no VALU divide.
    return 0.5 * jnp.tanh(0.5 * x) + 0.5


def _mlp_kernel(x_ref, w1_ref, b1_ref, w2_ref, b2_ref, o_ref, *, apply_sigmoid):
    # One grid step: (TILE_B, D_in) @ (D_in, H_pad) -> sigmoid -> @ (H_pad, D_out).
    # Both matmuls use f32 MXU accumulation; epilogue math stays f32 (v5e-safe).
    x = x_ref[...]
    h = jnp.dot(x, w1_ref[...], preferred_element_type=jnp.float32) + b1_ref[...]
    h = _stable_sigmoid(h)
    y = jnp.dot(h.astype(w2_ref.dtype), w2_ref[...],
                preferred_element_type=jnp.float32) + b2_ref[...]
    if apply_sigmoid:  # predict_proba path: final sigmoid fused in-kernel
        y = _stable_sigmoid(y)
    o_ref[...] = y.astype(o_ref.dtype)  # unpadded (TILE_B, D_out) store


def prepare_params(w1, b1, w2, b2, matmul_dtype=jnp.float32):
    """One-time parameter prep (hoisted out of the per-forward path).

    Converts PyTorch nn.Linear (out_features, in_features) weights to the
    MXU-friendly (in, out) layout.  Only the *hidden* axis is padded to the
    128-lane width (it never touches HBM inside the kernel); padded hidden
    columns have zero weights into linear2, so results are exact.  Biases are
    kept f32 (added after f32 accumulation).  Set matmul_dtype=jnp.bfloat16 on
    v6e/v7x to halve input DMA bytes (keep f32 accumulation).
    """
    H, D_in = w1.shape
    D_out = w2.shape[0]
    H_p = _round_up(H, _LANE)

    w1_p = jnp.zeros((D_in, H_p), matmul_dtype).at[:, :H].set(w1.T.astype(matmul_dtype))
    b1_p = jnp.zeros((1, H_p), jnp.float32).at[0, :H].set(b1.astype(jnp.float32))
    w2_p = jnp.zeros((H_p, D_out), matmul_dtype).at[:H, :].set(w2.T.astype(matmul_dtype))
    b2_p = b2.astype(jnp.float32).reshape(1, D_out)
    return (w1_p, b1_p, w2_p, b2_p), D_out


@functools.partial(jax.jit, static_argnums=(2,), static_argnames=("apply_sigmoid",))
def net_with_logits_forward(x, params, d_out, *, apply_sigmoid=False):
    """x: (B, D_in); params from prepare_params; returns (B, d_out) f32 logits/probs."""
    w1_p, b1_p, w2_p, b2_p = params
    B, D_in = x.shape
    H_p = w1_p.shape[1]

    # Cast inputs to the matmul dtype chosen at param-prep time (f32 or bf16).
    x = x.astype(w1_p.dtype)

    tile_b = _choose_tile_b(B)
    B_p = _round_up(B, tile_b)
    if B_p != B:
        x = jnp.pad(x, ((0, B_p - B), (0, 0)))
    n_steps = B_p // tile_b

    itemsize = jnp.dtype(w1_p.dtype).itemsize
    cost = pl.CostEstimate(
        flops=2 * B_p * (D_in * H_p + H_p * d_out),
        transcendentals=B_p * (H_p + (d_out if apply_sigmoid else 0)),
        bytes_accessed=(B_p * D_in * itemsize                      # x read
                        + (w1_p.size + w2_p.size) * itemsize       # weights
                        + (b1_p.size + b2_p.size) * 4              # biases
                        + B_p * d_out * 4),                        # output write
    )

    kernel = functools.partial(_mlp_kernel, apply_sigmoid=apply_sigmoid)
    y = pl.pallas_call(
        kernel,
        out_shape=jax.ShapeDtypeStruct((B_p, d_out), jnp.float32),
        grid=(n_steps,),
        in_specs=[
            pl.BlockSpec((tile_b, D_in), lambda i: (i, 0)),   # x tiles over batch
            pl.BlockSpec((D_in, H_p), lambda i: (0, 0)),      # weights resident
            pl.BlockSpec((1, H_p), lambda i: (0, 0)),
            pl.BlockSpec((H_p, d_out), lambda i: (0, 0)),     # last dim == full array dim
            pl.BlockSpec((1, d_out), lambda i: (0, 0)),
        ],
        out_specs=pl.BlockSpec((tile_b, d_out), lambda i: (i, 0)),  # unpadded output
        compiler_params=pltpu.CompilerParams(
            dimension_semantics=("parallel",)),
        cost_estimate=cost,
    )(x, w1_p, b1_p, w2_p, b2_p)

    return y[:B] if B_p != B else y


def predict_proba(x, params, d_out):
    # Matches NetWithLogits.predict_proba; final sigmoid is fused in the kernel.
    return net_with_logits_forward(x, params, d_out, apply_sigmoid=True)


if __name__ == "__main__":
    # Small shapes consistent with the module: D_in=4, H=32, D_out=3, batch=8.
    B, D_in, H, D_out = 8, 4, 32, 3

    key = jax.random.PRNGKey(0)
    kx, k1, k2, k3, k4, kx2 = jax.random.split(key, 6)

    x = jax.random.normal(kx, (B, D_in), dtype=jnp.float32)

    # Deterministic PyTorch-style Linear init: U(-1/sqrt(fan_in), 1/sqrt(fan_in)).
    bound1 = 1.0 / jnp.sqrt(jnp.float32(D_in))
    w1 = jax.random.uniform(k1, (H, D_in), jnp.float32, -bound1, bound1)
    b1 = jax.random.uniform(k2, (H,), jnp.float32, -bound1, bound1)
    bound2 = 1.0 / jnp.sqrt(jnp.float32(H))
    w2 = jax.random.uniform(k3, (D_out, H), jnp.float32, -bound2, bound2)
    b2 = jax.random.uniform(k4, (D_out,), jnp.float32, -bound2, bound2)

    # One-time parameter prep (transpose + hidden-lane padding), hoisted out of
    # the per-forward path.  f32 default keeps v5e-safe and exact vs. reference.
    params, d_out = prepare_params(w1, b1, w2, b2)

    def ref_forward(xi):
        return jax.nn.sigmoid(xi @ w1.T + b1) @ w2.T + b2

    # --- tiny batch: single grid step ---
    logits = net_with_logits_forward(x, params, d_out)
    jax.block_until_ready(logits)
    ref_logits = ref_forward(x)
    assert logits.shape == (B, D_out)
    assert jnp.allclose(logits, ref_logits, atol=1e-5, rtol=1e-4)

    probs = predict_proba(x, params, d_out)
    jax.block_until_ready(probs)
    assert jnp.allclose(probs, jax.nn.sigmoid(ref_logits), atol=1e-5, rtol=1e-4)

    # --- larger batch: exercises multi-step grid, adaptive tile, batch padding ---
    B2 = 300
    x2 = jax.random.normal(kx2, (B2, D_in), dtype=jnp.float32)
    logits2 = net_with_logits_forward(x2, params, d_out)
    jax.block_until_ready(logits2)
    assert logits2.shape == (B2, D_out)
    assert jnp.allclose(logits2, ref_forward(x2), atol=1e-5, rtol=1e-4)

    print("KERNEL_OK")
</pallas_src>

<mosaic_0001>
module attributes {stable_mosaic.version = 11 : i64} {
  func.func @_mlp_kernel(%arg0: i32, %arg1: memref<8x4xf32, #tpu.memory_space<vmem>>, %arg2: memref<4x128xf32, #tpu.memory_space<vmem>>, %arg3: memref<1x128xf32, #tpu.memory_space<vmem>>, %arg4: memref<128x3xf32, #tpu.memory_space<vmem>>, %arg5: memref<1x3xf32, #tpu.memory_space<vmem>>, %arg6: memref<8x3xf32, #tpu.memory_space<vmem>>) attributes {dimension_semantics = [#tpu.dimension_semantics<parallel>], iteration_bounds = array<i64: 1>, scalar_prefetch = 0 : i64, scratch_operands = 0 : i64, tpu.core_type = #tpu.core_type<tc>, window_params = [{transform_indices = @transform_0, window_bounds = array<i64: 8, 4>}, {pipeline_mode = #tpu.pipeline_mode<synchronous>, transform_indices = @transform_1, window_bounds = array<i64: 4, 128>}, {pipeline_mode = #tpu.pipeline_mode<synchronous>, transform_indices = @transform_2, window_bounds = array<i64: 1, 128>}, {pipeline_mode = #tpu.pipeline_mode<synchronous>, transform_indices = @transform_3, window_bounds = array<i64: 128, 3>}, {pipeline_mode = #tpu.pipeline_mode<synchronous>, transform_indices = @transform_4, window_bounds = array<i64: 1, 3>}, {transform_indices = @transform_5, window_bounds = array<i64: 8, 3>}]} {
    %c0 = arith.constant 0 : index
    %c0_0 = arith.constant 0 : index
    %0 = vector.load %arg1[%c0, %c0_0] : memref<8x4xf32, #tpu.memory_space<vmem>>, vector<8x4xf32>
    %c0_1 = arith.constant 0 : index
    %c0_2 = arith.constant 0 : index
    %1 = vector.load %arg2[%c0_1, %c0_2] : memref<4x128xf32, #tpu.memory_space<vmem>>, vector<4x128xf32>
    %cst = arith.constant dense<0.000000e+00> : vector<8x128xf32>
    %2 = tpu.matmul %0, %1, %cst {dimension_numbers = #tpu.dot_dimension_numbers<[1], [0], [0], [1], [0, 0, 1, 1], [], []>} : vector<8x4xf32>, vector<4x128xf32>, vector<8x128xf32> -> vector<8x128xf32>
    %c0_3 = arith.constant 0 : index
    %c0_4 = arith.constant 0 : index
    %3 = vector.load %arg3[%c0_3, %c0_4] : memref<1x128xf32, #tpu.memory_space<vmem>>, vector<1x128xf32>
    %4 = vector.broadcast %3 : vector<1x128xf32> to vector<8x128xf32>
    %5 = arith.addf %2, %4 : vector<8x128xf32>
    %cst_5 = arith.constant 5.000000e-01 : f32
    %6 = vector.broadcast %cst_5 : f32 to vector<8x128xf32>
    %7 = arith.mulf %6, %5 : vector<8x128xf32>
    %8 = math.tanh %7 : vector<8x128xf32>
    %cst_6 = arith.constant 5.000000e-01 : f32
    %9 = vector.broadcast %cst_6 : f32 to vector<8x128xf32>
    %10 = arith.mulf %9, %8 : vector<8x128xf32>
    %cst_7 = arith.constant 5.000000e-01 : f32
    %11 = vector.broadcast %cst_7 : f32 to vector<8x128xf32>
    %12 = arith.addf %10, %11 : vector<8x128xf32>
    %c0_8 = arith.constant 0 : index
    %c0_9 = arith.constant 0 : index
    %13 = vector.load %arg4[%c0_8, %c0_9] : memref<128x3xf32, #tpu.memory_space<vmem>>, vector<128x3xf32>
    %cst_10 = arith.constant dense<0.000000e+00> : vector<8x3xf32>
    %14 = tpu.matmul %12, %13, %cst_10 {dimension_numbers = #tpu.dot_dimension_numbers<[1], [0], [0], [1], [0, 0, 1, 1], [], []>} : vector<8x128xf32>, vector<128x3xf32>, vector<8x3xf32> -> vector<8x3xf32>
    %c0_11 = arith.constant 0 : index
    %c0_12 = arith.constant 0 : index
    %15 = vector.load %arg5[%c0_11, %c0_12] : memref<1x3xf32, #tpu.memory_space<vmem>>, vector<1x3xf32>
    %16 = vector.broadcast %15 : vector<1x3xf32> to vector<8x3xf32>
    %17 = arith.addf %14, %16 : vector<8x3xf32>
    %c0_13 = arith.constant 0 : index
    %c0_14 = arith.constant 0 : index
    %18 = vector.load %arg6[%c0_13, %c0_14] : memref<8x3xf32, #tpu.memory_space<vmem>>, vector<8x3xf32>
    tpu.vector_store %arg6[%c0_13, %c0_14], %17 {strides = array<i32>} : memref<8x3xf32, #tpu.memory_space<vmem>>, vector<8x3xf32>,
    return
  }
  func.func @transform_0(%arg0: i32) -> (i32, i32) {
    %c0_i32 = arith.constant 0 : i32
    %c0_i32_0 = arith.constant 0 : i32
    return %arg0, %c0_i32 : i32, i32
  }
  func.func @transform_1(%arg0: i32) -> (i32, i32) {
    %c0_i32 = arith.constant 0 : i32
    %c0_i32_0 = arith.constant 0 : i32
    %c0_i32_1 = arith.constant 0 : i32
    return %c0_i32, %c0_i32_0 : i32, i32
  }
  func.func @transform_2(%arg0: i32) -> (i32, i32) {
    %c0_i32 = arith.constant 0 : i32
    %c0_i32_0 = arith.constant 0 : i32
    %c0_i32_1 = arith.constant 0 : i32
    return %c0_i32, %c0_i32_0 : i32, i32
  }
  func.func @transform_3(%arg0: i32) -> (i32, i32) {
    %c0_i32 = arith.constant 0 : i32
    %c0_i32_0 = arith.constant 0 : i32
    %c0_i32_1 = arith.constant 0 : i32
    return %c0_i32, %c0_i32_0 : i32, i32
  }
  func.func @transform_4(%arg0: i32) -> (i32, i32) {
    %c0_i32 = arith.constant 0 : i32
    %c0_i32_0 = arith.constant 0 : i32
    %c0_i32_1 = arith.constant 0 : i32
    return %c0_i32, %c0_i32_0 : i32, i32
  }
  func.func @transform_5(%arg0: i32) -> (i32, i32) {
    %c0_i32 = arith.constant 0 : i32
    %c0_i32_0 = arith.constant 0 : i32
    return %arg0, %c0_i32 : i32, i32
  }
}

</mosaic_0001>

<llo_original>
// kernel: net_with_logits_forward.1
$region0: #{net_with_logits_forward.1}
  #allocation0 [shape = 'u32[]', space=smem, size = 0x4, offset = 0x4, fixed_abs, tag = 'smem constant byte address 0x4 - core index']
  #allocation1 [shape = 'u32[144,128]{1,0:T(1,128)}', space=vmem, size = 0x12000, scoped, tag = 'internal scratch']
  %s0 = inlined_call_operand.vmem [shape: f32[8,4], index: 0, kind: input, shape index: {}]
  %s1 = inlined_call_operand.vmem [shape: f32[4,128], index: 1, kind: input, shape index: {}]
  %s2 = inlined_call_operand.vmem [shape: f32[1,128], index: 2, kind: input, shape index: {}]
  %s3 = inlined_call_operand.vmem [shape: f32[128,3], index: 3, kind: input, shape index: {}]
  %s4 = inlined_call_operand.vmem [shape: f32[1,3], index: 4, kind: input, shape index: {}]
  %s5 = inlined_call_operand.vmem [shape: f32[8,3], index: 5, kind: output, shape index: {}]
  %s6 = sld [smem:[#allocation0]]
  $region30: #{net_with_logits_forward.1} parent=0
    _
  %s8 = ssub.s32 1, %s6
  %s9 = scalar_select 0, %s8, %s6
  // Predicated region
  $region2: #{net_with_logits_forward.1} parent=0 // pred_check
    _
  $region3: #{net_with_logits_forward.1} parent=0 // pred_check_branch
    %11 = sbr.rel (0) target = $region5
  $region4: #{net_with_logits_forward.1} parent=0 // pred_region
    _
  $region5: #{net_with_logits_forward.1} parent=0 // pred_fallthru
    _
  // Predicated region
  $region6: #{net_with_logits_forward.1} parent=0 // pred_check
    _
  $region7: #{net_with_logits_forward.1} parent=0 // pred_check_branch
    %13 = sbr.rel (0) target = $region9
  $region8: #{net_with_logits_forward.1} parent=0 // pred_region
    _
  $region9: #{net_with_logits_forward.1} parent=0 // pred_fallthru
    _
  // Predicated region
  $region10: #{net_with_logits_forward.1} parent=0 // pred_check
    _
  $region11: #{net_with_logits_forward.1} parent=0 // pred_check_branch
    %15 = sbr.rel (0) target = $region13
  $region12: #{net_with_logits_forward.1} parent=0 // pred_region
    _
  $region13: #{net_with_logits_forward.1} parent=0 // pred_fallthru
    _
  // Predicated region
  $region14: #{net_with_logits_forward.1} parent=0 // pred_check
    _
  $region15: #{net_with_logits_forward.1} parent=0 // pred_check_branch
    %17 = sbr.rel (0) target = $region17
  $region16: #{net_with_logits_forward.1} parent=0 // pred_region
    _
  $region17: #{net_with_logits_forward.1} parent=0 // pred_fallthru
    _
  // Predicated region
  $region18: #{net_with_logits_forward.1} parent=0 // pred_check
    _
  $region19: #{net_with_logits_forward.1} parent=0 // pred_check_branch
    %19 = sbr.rel (0) target = $region21
  $region20: #{net_with_logits_forward.1} parent=0 // pred_region
    _
  $region21: #{net_with_logits_forward.1} parent=0 // pred_fallthru
    _
  %v20 = vld [vmem:[%s0] sm:$0xff]
  %v21 = vld [vmem:[%s1] sm:$0xf]
  %v22 = vld [vmem:[%s2] sm:$0x1]
  %v24 = vlaneseq
  %v25 = vshrl.u32 %v24, 7
  %v26 = vsub.s32 0, %v25
  %v27 = vrot.slane %v22, %v26
  %vm29 = vcmask 31744
  %v31 = vsel %vm29, %v20, 0
  %vm33 = vcmask 1043456
  %v35 = vsel %vm33, %v21, 0
  %37 = vmatprep.subr.mxu0 0.0
  %38 = vmatpush1.msra.mxu0 %v35
  %39 = vmatprep.subr.mxu0 0.0
  %40 = vmatpush1.msra.mxu0 0.0
  %41 = vmatprep.subr.mxu0 0.0
  %42 = vmatpush1.msra.mxu0 0.0
  %43 = vmatprep.subr.mxu0 0.0
  %44 = vmatpush1.msra.mxu0 0.0
  %45 = vmatprep.subr.mxu0 0.0
  %46 = vmatpush1.msra.mxu0 0.0
  %47 = vmatprep.subr.mxu0 0.0
  %48 = vmatpush1.msra.mxu0 0.0
  %49 = vmatprep.subr.mxu0 0.0
  %50 = vmatpush1.msra.mxu0 0.0
  %51 = vmatprep.subr.mxu0 0.0
  %52 = vmatpush1.msra.mxu0 0.0
  %53 = vmatprep.subr.mxu0 0.0
  %54 = vmatpush1.msra.mxu0 0.0
  %55 = vmatprep.subr.mxu0 0.0
  %56 = vmatpush1.msra.mxu0 0.0
  %57 = vmatprep.subr.mxu0 0.0
  %58 = vmatpush1.msra.mxu0 0.0
  %59 = vmatprep.subr.mxu0 0.0
  %60 = vmatpush1.msra.mxu0 0.0
  %61 = vmatprep.subr.mxu0 0.0
  %62 = vmatpush1.msra.mxu0 0.0
  %63 = vmatprep.subr.mxu0 0.0
  %64 = vmatpush1.msra.mxu0 0.0
  %65 = vmatprep.subr.mxu0 0.0
  %66 = vmatpush1.msra.mxu0 0.0
  %67 = vmatprep.subr.mxu0 0.0
  %68 = vmatpush1.msra.mxu0 0.0
  %69 = vmatprep.subr.mxu0 0.0
  %70 = vmatpush1.msra.mxu0 0.0
  %71 = vmatprep.subr.mxu0 0.0
  %72 = vmatpush1.msra.mxu0 0.0
  %73 = vmatprep.subr.mxu0 0.0
  %74 = vmatpush1.msra.mxu0 0.0
  %75 = vmatprep.subr.mxu0 0.0
  %76 = vmatpush1.msra.mxu0 0.0
  %77 = vmatprep.subr.mxu0 0.0
  %78 = vmatpush1.msra.mxu0 0.0
  %79 = vmatprep.subr.mxu0 0.0
  %80 = vmatpush1.msra.mxu0 0.0
  %81 = vmatprep.subr.mxu0 0.0
  %82 = vmatpush1.msra.mxu0 0.0
  %83 = vmatprep.subr.mxu0 0.0
  %84 = vmatpush1.msra.mxu0 0.0
  %85 = vmatprep.subr.mxu0 0.0
  %86 = vmatpush1.msra.mxu0 0.0
  %87 = vmatprep.subr.mxu0 0.0
  %88 = vmatpush1.msra.mxu0 0.0
  %89 = vmatprep.subr.mxu0 0.0
  %90 = vmatpush1.msra.mxu0 0.0
  %91 = vmatprep.subr.mxu0 0.0
  %92 = vmatpush1.msra.mxu0 0.0
  %93 = vmatprep.subr.mxu0 0.0
  %94 = vmatpush1.msra.mxu0 0.0
  %95 = vmatprep.subr.mxu0 0.0
  %96 = vmatpush1.msra.mxu0 0.0
  %97 = vmatprep.subr.mxu0 0.0
  %98 = vmatpush1.msra.mxu0 0.0
  %99 = vmatprep.subr.mxu0 0.0
  %100 = vmatpush1.msra.mxu0 0.0
  %101 = vmatprep.mubr.f32.mxu0 0.0
  %102 = vmatmul.mubr.f32.gmra.mrb[0].mxu0 %v31
  %v103 = vpop.f32.mrb[0].mxu0
  %v104 = vadd.f32 %v27, %v103
  %v105 = vpop.f32.mrb[0].mxu0
  %106 = vdwg.mxu0
  %v107 = vmul.f32 %v104, 0.5
  %v108 = vtanh.pop %v107
  %v109 = vmul.f32 %v108, 0.5
  %v110 = vadd.f32 %v109, 0.5
  %v111 = vld [vmem:[%s3] sm:$0xff]
  %v112 = vld [vmem:[%s3 + $0x8] sm:$0xff]
  %v113 = vld [vmem:[%s3 + $0x10] sm:$0xff]
  %v114 = vld [vmem:[%s3 + $0x18] sm:$0xff]
  %v115 = vld [vmem:[%s3 + $0x20] sm:$0xff]
  %v116 = vld [vmem:[%s3 + $0x28] sm:$0xff]
  %v117 = vld [vmem:[%s3 + $0x30] sm:$0xff]
  %v118 = vld [vmem:[%s3 + $0x38] sm:$0xff]
  %v119 = vld [vmem:[%s3 + $0x40] sm:$0xff]
  %v120 = vld [vmem:[%s3 + $0x48] sm:$0xff]
  %v121 = vld [vmem:[%s3 + $0x50] sm:$0xff]
  %v122 = vld [vmem:[%s3 + $0x58] sm:$0xff]
  %v123 = vld [vmem:[%s3 + $0x60] sm:$0xff]
  %v124 = vld [vmem:[%s3 + $0x68] sm:$0xff]
  %v125 = vld [vmem:[%s3 + $0x70] sm:$0xff]
  %v126 = vld [vmem:[%s3 + $0x78] sm:$0xff]
  %v127 = vld [vmem:[%s4] sm:$0x1]
  %v129 = vlaneseq
  %v130 = vshrl.u32 %v129, 7
  %v131 = vsub.s32 0, %v130
  %v132 = vrot.slane %v127, %v131
  %134 = vmatprep.subr.mxu0 0.0
  %135 = vmatpush1.msra.mxu0 %v111
  %136 = vmatprep.subr.mxu0 0.0
  %137 = vmatpush1.msra.mxu0 %v112
  %138 = vmatprep.subr.mxu0 0.0
  %139 = vmatpush1.msra.mxu0 %v113
  %140 = vmatprep.subr.mxu0 0.0
  %141 = vmatpush1.msra.mxu0 %v114
  %142 = vmatprep.subr.mxu0 0.0
  %143 = vmatpush1.msra.mxu0 %v115
  %144 = vmatprep.subr.mxu0 0.0
  %145 = vmatpush1.msra.mxu0 %v116
  %146 = vmatprep.subr.mxu0 0.0
  %147 = vmatpush1.msra.mxu0 %v117
  %148 = vmatprep.subr.mxu0 0.0
  %149 = vmatpush1.msra.mxu0 %v118
  %150 = vmatprep.subr.mxu0 0.0
  %151 = vmatpush1.msra.mxu0 %v119
  %152 = vmatprep.subr.mxu0 0.0
  %153 = vmatpush1.msra.mxu0 %v120
  %154 = vmatprep.subr.mxu0 0.0
  %155 = vmatpush1.msra.mxu0 %v121
  %156 = vmatprep.subr.mxu0 0.0
  %157 = vmatpush1.msra.mxu0 %v122
  %158 = vmatprep.subr.mxu0 0.0
  %159 = vmatpush1.msra.mxu0 %v123
  %160 = vmatprep.subr.mxu0 0.0
  %161 = vmatpush1.msra.mxu0 %v124
  %162 = vmatprep.subr.mxu0 0.0
  %163 = vmatpush1.msra.mxu0 %v125
  %164 = vmatprep.subr.mxu0 0.0
  %165 = vmatpush1.msra.mxu0 %v126
  %166 = vmatprep.subr.mxu0 0.0
  %167 = vmatpush1.msra.mxu0 0.0
  %168 = vmatprep.subr.mxu0 0.0
  %169 = vmatpush1.msra.mxu0 0.0
  %170 = vmatprep.subr.mxu0 0.0
  %171 = vmatpush1.msra.mxu0 0.0
  %172 = vmatprep.subr.mxu0 0.0
  %173 = vmatpush1.msra.mxu0 0.0
  %174 = vmatprep.subr.mxu0 0.0
  %175 = vmatpush1.msra.mxu0 0.0
  %176 = vmatprep.subr.mxu0 0.0
  %177 = vmatpush1.msra.mxu0 0.0
  %178 = vmatprep.subr.mxu0 0.0
  %179 = vmatpush1.msra.mxu0 0.0
  %180 = vmatprep.subr.mxu0 0.0
  %181 = vmatpush1.msra.mxu0 0.0
  %182 = vmatprep.subr.mxu0 0.0
  %183 = vmatpush1.msra.mxu0 0.0
  %184 = vmatprep.subr.mxu0 0.0
  %185 = vmatpush1.msra.mxu0 0.0
  %186 = vmatprep.subr.mxu0 0.0
  %187 = vmatpush1.msra.mxu0 0.0
  %188 = vmatprep.subr.mxu0 0.0
  %189 = vmatpush1.msra.mxu0 0.0
  %190 = vmatprep.subr.mxu0 0.0
  %191 = vmatpush1.msra.mxu0 0.0
  %192 = vmatprep.subr.mxu0 0.0
  %193 = vmatpush1.msra.mxu0 0.0
  %194 = vmatprep.subr.mxu0 0.0
  %195 = vmatpush1.msra.mxu0 0.0
  %196 = vmatprep.subr.mxu0 0.0
  %197 = vmatpush1.msra.mxu0 0.0
  %198 = vmatprep.mubr.f32.mxu0 0.0
  %199 = vmatmul.mubr.f32.gmra.mrb[0].mxu0 %v110
  %v200 = vpop.f32.mrb[0].mxu0
  %v201 = vadd.f32 %v132, %v200
  %v202 = vpop.f32.mrb[0].mxu0
  %203 = vdwg.mxu0
  %vm204 = vcmask 23552
  %205 = vst.msk [vmem:[%s5] sm:$0xff] %vm204, %v201
  // Predicated region
  $region22: #{net_with_logits_forward.1} parent=0 // pred_check
    _
  $region23: #{net_with_logits_forward.1} parent=0 // pred_check_branch
    %207 = sbr.rel (0) target = $region25
  $region24: #{net_with_logits_forward.1} parent=0 // pred_region
    _
  $region25: #{net_with_logits_forward.1} parent=0 // pred_fallthru
    _
  // Predicated region
  $region26: #{net_with_logits_forward.1} parent=0 // pred_check
    _
  $region27: #{net_with_logits_forward.1} parent=0 // pred_check_branch
    %209 = sbr.rel (0) target = $region29
  $region28: #{net_with_logits_forward.1} parent=0 // pred_region
    _
  $region29: #{net_with_logits_forward.1} parent=0 // pred_fallthru
    _

</llo_original>
